<compile_context>
chip_gen: v5e
topology: v5e:2x2
jax: 0.10.0
libtpu: 0.0.40
codegen_flags: <defaults>
</compile_context>

<pallas_src>
import functools

import jax
import jax.numpy as jnp
from jax.experimental import pallas as pl
from jax.experimental.pallas import tpu as pltpu


def _snapshot_kernel(update_ref, state_ref, snaps_ref, new_state_ref, *,
                     snapshot_size, stride_size, batch_size, window_len,
                     state_len, update_len):
    """update_ref: (Cb, U), state_ref: (Cb, S)
       snaps_ref:  (Cb, B*L)  -- window b occupies lanes [b*L, (b+1)*L)
       new_state_ref: (Cb, snapshot_size)
    All slice bounds are static Python ints -> fully unrolled copies; exactly
    one read pass over the sources and one write pass over the outputs."""
    tail = state_len - stride_size          # samples contributed by old state
    total = tail + update_len               # length of the virtual concat
    L = window_len

    # --- overlapping windows, copied straight from the sources (no concat) ---
    for b in range(batch_size):             # small, static -> unrolled
        start = b * stride_size
        n_state = min(max(tail - start, 0), L)
        n_upd = L - n_state
        base = b * L
        if n_state > 0:
            snaps_ref[:, base:base + n_state] = state_ref[
                :, stride_size + start: stride_size + start + n_state]
        if n_upd > 0:
            u_off = max(start - tail, 0)
            snaps_ref[:, base + n_state: base + L] = update_ref[
                :, u_off:u_off + n_upd]

    # --- new internal state = most recent `snapshot_size` samples ---
    ns_start = total - snapshot_size
    n_state = min(max(tail - ns_start, 0), snapshot_size)
    n_upd = snapshot_size - n_state
    if n_state > 0:
        new_state_ref[:, 0:n_state] = state_ref[
            :, stride_size + ns_start: stride_size + ns_start + n_state]
    if n_upd > 0:
        u_off = max(ns_start - tail, 0)
        new_state_ref[:, n_state:snapshot_size] = update_ref[
            :, u_off:u_off + n_upd]


def _round_up(x, m):
    return -(-x // m) * m


def _sublane_tile(dtype):
    """Channel-block alignment: 8 rows for 32-bit, 16 for bf16, 32 for int8."""
    return 8 * max(1, 4 // jnp.dtype(dtype).itemsize)


def _vmem_budget():
    """(block budget, scoped vmem limit) derived from the chip's VMEM size."""
    try:
        cap = getattr(pltpu.get_tpu_info(), "vmem_capacity_bytes", None)
    except Exception:                       # off-TPU tracing / older runtimes
        cap = None
    if cap is None or cap <= (64 << 20):    # v7x-class (64 MiB) or unknown
        return 20 << 20, 48 << 20
    return 48 << 20, 100 << 20              # v5e / v6e (128 MiB physical)


def _pick_c_block(c, *, per_channel_bytes, tile, budget_bytes):
    """Largest sublane-aligned channel block whose double-buffered footprint
    fits the budget, while keeping >= 2 grid steps when C allows (so the
    'parallel' channel axis can use both TensorCores on v7x)."""
    max_cb = max(1, budget_bytes // max(per_channel_bytes, 1))
    if max_cb >= c:
        if c > tile:
            return min(c, _round_up(_round_up(c, 2) // 2, tile))
        return c
    if max_cb < tile:
        return min(c, tile)
    return (max_cb // tile) * tile


def snapshotter_forward(update, snapshot, *, snapshot_size, stride_size,
                        batch_size, channels_per_snapshot, c_block=None):
    """Mirrors Snapshotter.forward.

    Returns tuple(per-group snapshots) + (new_state,), new_state shaped
    (1, C, snapshot_size).  The incoming `snapshot` buffer is aliased to the
    new state (input_output_aliases) and must not be reused by the caller.
    """
    assert update.ndim == 3 and snapshot.ndim == 3
    assert update.shape[0] == 1 and snapshot.shape[0] == 1
    c = snapshot.shape[1]
    s = snapshot.shape[2]
    u = update.shape[2]
    assert update.shape[1] == c
    assert s == snapshot_size, "state length must equal snapshot_size"
    w = s - stride_size + u                     # length after shift + concat
    assert w >= snapshot_size, "not enough samples to form the new state"
    l = w - (batch_size - 1) * stride_size      # unfold window length
    assert l > 0

    dtype = update.dtype
    snapshot = snapshot.astype(dtype)
    itemsize = jnp.dtype(dtype).itemsize
    tile = _sublane_tile(dtype)
    budget_bytes, vmem_limit = _vmem_budget()

    if c_block is None:
        per_channel = (_round_up(u, 128) + 2 * _round_up(s, 128)
                       + _round_up(batch_size * l, 128)) * itemsize * 2
        c_block = _pick_c_block(c, per_channel_bytes=per_channel, tile=tile,
                                budget_bytes=budget_bytes)
    c_block = max(1, min(c_block, c))
    n_blocks = pl.cdiv(c, c_block)

    kernel = functools.partial(
        _snapshot_kernel,
        snapshot_size=snapshot_size,
        stride_size=stride_size,
        batch_size=batch_size,
        window_len=l,
        state_len=s,
        update_len=u,
    )

    # pure copy kernel: zero FLOPs, bytes = one read of (update, state) plus
    # one write of (snaps, new_state)
    bytes_accessed = itemsize * c * (u + 2 * s + batch_size * l)

    snaps_flat, new_state = pl.pallas_call(
        kernel,
        grid=(n_blocks,),
        out_shape=(
            jax.ShapeDtypeStruct((c, batch_size * l), dtype),  # lane-dense slab
            jax.ShapeDtypeStruct((c, snapshot_size), dtype),
        ),
        in_specs=[
            pl.BlockSpec((c_block, u), lambda i: (i, 0)),
            pl.BlockSpec((c_block, s), lambda i: (i, 0)),
        ],
        out_specs=(
            pl.BlockSpec((c_block, batch_size * l), lambda i: (i, 0)),
            pl.BlockSpec((c_block, snapshot_size), lambda i: (i, 0)),
        ),
        # recurrent state update: reuse the incoming state buffer for new_state
        input_output_aliases={1: 1},
        cost_estimate=pl.CostEstimate(
            flops=0, transcendentals=0, bytes_accessed=bytes_accessed),
        compiler_params=pltpu.CompilerParams(
            dimension_semantics=("parallel",),
            vmem_limit_bytes=vmem_limit,
        ),
    )(update[0], snapshot[0])

    # (C, B*L) -> (C, B, L): free (bitcast) reshape; channel-group split is a
    # contiguous leading-axis slice.  Only the transpose to the module's
    # (B, C_g, L) API layout remains as wrapper glue.
    snaps = snaps_flat.reshape(c, batch_size, l)

    def _to_api(x):                             # (C_g, B, L) -> (B, C_g, L)
        return jnp.transpose(x, (1, 0, 2))

    if len(channels_per_snapshot) > 1:
        outs = []
        off = 0
        for i in channels_per_snapshot:
            n = i or 1                          # zero-sized group consumes one
            x = _to_api(snaps[off:off + n])     # channel and is squeezed
            if i == 0:
                x = x[:, 0]
            outs.append(x)
            off += n
        outs = tuple(outs)
    else:
        outs = (_to_api(snaps),)

    return outs + (new_state[None],)            # state back to (1, C, snapshot_size)


def _reference(update, snapshot, *, snapshot_size, stride_size, batch_size,
               channels_per_snapshot):
    """Pure-jnp replica of the PyTorch forward for verification."""
    snap = jnp.concatenate([snapshot[:, :, stride_size:], update], axis=-1)
    w = snap.shape[-1]
    if batch_size > 1:
        l = w - (batch_size - 1) * stride_size
        snapshots = jnp.stack(
            [snap[0, :, b * stride_size: b * stride_size + l]
             for b in range(batch_size)], axis=0)
    else:
        snapshots = snap
    if len(channels_per_snapshot) > 1:
        outs = []
        off = 0
        for i in channels_per_snapshot:
            n = i or 1
            x = snapshots[:, off:off + n]
            if i == 0:
                x = x[:, 0]
            outs.append(x)
            off += n
        outs = tuple(outs)
    else:
        outs = (snapshots,)
    return outs + (snap[:, :, -snapshot_size:],)


if __name__ == "__main__":
    # small config consistent with the module; C chosen so the auto block
    # picker produces two channel blocks (exercises the blocked grid).
    snapshot_size = 16
    stride_size = 4
    batch_size = 2
    channels_per_snapshot = [8, 0, 7]                 # 0 -> single channel, squeezed
    num_channels = sum(i or 1 for i in channels_per_snapshot)   # 16

    key = jax.random.PRNGKey(0)
    k1, k2 = jax.random.split(key)
    # update carries stride_size * batch_size new samples per call
    update = jax.random.normal(
        k1, (1, num_channels, stride_size * batch_size), jnp.float32)
    # internal state holds the last snapshot_size samples
    snapshot = jax.random.normal(
        k2, (1, num_channels, snapshot_size), jnp.float32)

    # compute the reference first: the kernel aliases (may donate) `snapshot`
    refs = _reference(
        update, snapshot,
        snapshot_size=snapshot_size, stride_size=stride_size,
        batch_size=batch_size, channels_per_snapshot=channels_per_snapshot)
    refs = jax.block_until_ready(refs)

    outs = snapshotter_forward(
        update, snapshot,
        snapshot_size=snapshot_size, stride_size=stride_size,
        batch_size=batch_size, channels_per_snapshot=channels_per_snapshot)
    outs = jax.block_until_ready(outs)

    assert len(outs) == len(refs)
    for o, r in zip(outs, refs):
        assert o.shape == r.shape, (o.shape, r.shape)
        assert jnp.allclose(o, r, atol=1e-6), "mismatch vs reference"

    print("KERNEL_OK")
</pallas_src>

<mosaic_0001>
module attributes {stable_mosaic.version = 11 : i64} {
  func.func @_snapshot_kernel(%arg0: i32, %arg1: memref<8x8xf32, #tpu.memory_space<vmem>>, %arg2: memref<8x16xf32, #tpu.memory_space<vmem>>, %arg3: memref<8x32xf32, #tpu.memory_space<vmem>>, %arg4: memref<8x16xf32, #tpu.memory_space<vmem>>) attributes {dimension_semantics = [#tpu.dimension_semantics<parallel>], iteration_bounds = array<i64: 2>, scalar_prefetch = 0 : i64, scratch_operands = 0 : i64, tpu.core_type = #tpu.core_type<tc>, window_params = [{transform_indices = @transform_0, window_bounds = array<i64: 8, 8>}, {transform_indices = @transform_1, window_bounds = array<i64: 8, 16>}, {transform_indices = @transform_2, window_bounds = array<i64: 8, 32>}, {transform_indices = @transform_3, window_bounds = array<i64: 8, 16>}]} {
    %c0 = arith.constant 0 : index
    %c4 = arith.constant 4 : index
    %0 = vector.load %arg2[%c0, %c4] : memref<8x16xf32, #tpu.memory_space<vmem>>, vector<8x12xf32>
    %c0_0 = arith.constant 0 : index
    %c0_1 = arith.constant 0 : index
    %1 = vector.load %arg3[%c0_0, %c0_1] : memref<8x32xf32, #tpu.memory_space<vmem>>, vector<8x12xf32>
    tpu.vector_store %arg3[%c0_0, %c0_1], %0 {strides = array<i32>} : memref<8x32xf32, #tpu.memory_space<vmem>>, vector<8x12xf32>,
    %c0_2 = arith.constant 0 : index
    %c0_3 = arith.constant 0 : index
    %2 = vector.load %arg1[%c0_2, %c0_3] : memref<8x8xf32, #tpu.memory_space<vmem>>, vector<8x4xf32>
    %c0_4 = arith.constant 0 : index
    %c12 = arith.constant 12 : index
    %3 = vector.load %arg3[%c0_4, %c12] : memref<8x32xf32, #tpu.memory_space<vmem>>, vector<8x4xf32>
    tpu.vector_store %arg3[%c0_4, %c12], %2 {strides = array<i32>} : memref<8x32xf32, #tpu.memory_space<vmem>>, vector<8x4xf32>,
    %c0_5 = arith.constant 0 : index
    %c8 = arith.constant 8 : index
    %4 = vector.load %arg2[%c0_5, %c8] : memref<8x16xf32, #tpu.memory_space<vmem>>, vector<8x8xf32>
    %c0_6 = arith.constant 0 : index
    %c16 = arith.constant 16 : index
    %5 = vector.load %arg3[%c0_6, %c16] : memref<8x32xf32, #tpu.memory_space<vmem>>, vector<8x8xf32>
    tpu.vector_store %arg3[%c0_6, %c16], %4 {strides = array<i32>} : memref<8x32xf32, #tpu.memory_space<vmem>>, vector<8x8xf32>,
    %c0_7 = arith.constant 0 : index
    %c0_8 = arith.constant 0 : index
    %6 = vector.load %arg1[%c0_7, %c0_8] : memref<8x8xf32, #tpu.memory_space<vmem>>, vector<8x8xf32>
    %c0_9 = arith.constant 0 : index
    %c24 = arith.constant 24 : index
    %7 = vector.load %arg3[%c0_9, %c24] : memref<8x32xf32, #tpu.memory_space<vmem>>, vector<8x8xf32>
    tpu.vector_store %arg3[%c0_9, %c24], %6 {strides = array<i32>} : memref<8x32xf32, #tpu.memory_space<vmem>>, vector<8x8xf32>,
    %c0_10 = arith.constant 0 : index
    %c8_11 = arith.constant 8 : index
    %8 = vector.load %arg2[%c0_10, %c8_11] : memref<8x16xf32, #tpu.memory_space<vmem>>, vector<8x8xf32>
    %c0_12 = arith.constant 0 : index
    %c0_13 = arith.constant 0 : index
    %9 = vector.load %arg4[%c0_12, %c0_13] : memref<8x16xf32, #tpu.memory_space<vmem>>, vector<8x8xf32>
    tpu.vector_store %arg4[%c0_12, %c0_13], %8 {strides = array<i32>} : memref<8x16xf32, #tpu.memory_space<vmem>>, vector<8x8xf32>,
    %c0_14 = arith.constant 0 : index
    %c0_15 = arith.constant 0 : index
    %10 = vector.load %arg1[%c0_14, %c0_15] : memref<8x8xf32, #tpu.memory_space<vmem>>, vector<8x8xf32>
    %c0_16 = arith.constant 0 : index
    %c8_17 = arith.constant 8 : index
    %11 = vector.load %arg4[%c0_16, %c8_17] : memref<8x16xf32, #tpu.memory_space<vmem>>, vector<8x8xf32>
    tpu.vector_store %arg4[%c0_16, %c8_17], %10 {strides = array<i32>} : memref<8x16xf32, #tpu.memory_space<vmem>>, vector<8x8xf32>,
    return
  }
  func.func @transform_0(%arg0: i32) -> (i32, i32) {
    %c0_i32 = arith.constant 0 : i32
    %c0_i32_0 = arith.constant 0 : i32
    return %arg0, %c0_i32 : i32, i32
  }
  func.func @transform_1(%arg0: i32) -> (i32, i32) {
    %c0_i32 = arith.constant 0 : i32
    %c0_i32_0 = arith.constant 0 : i32
    return %arg0, %c0_i32 : i32, i32
  }
  func.func @transform_2(%arg0: i32) -> (i32, i32) {
    %c0_i32 = arith.constant 0 : i32
    %c0_i32_0 = arith.constant 0 : i32
    return %arg0, %c0_i32 : i32, i32
  }
  func.func @transform_3(%arg0: i32) -> (i32, i32) {
    %c0_i32 = arith.constant 0 : i32
    %c0_i32_0 = arith.constant 0 : i32
    return %arg0, %c0_i32 : i32, i32
  }
}

</mosaic_0001>

<llo_original>
// kernel: tpu_custom_call.1
$region0: #{tpu_custom_call.1}
  #allocation0 [shape = 'u32[]', space=smem, size = 0x4, offset = 0x4, fixed_abs, tag = 'smem constant byte address 0x4 - core index']
  #allocation1 [shape = 'u32[72,128]{1,0:T(1,128)}', space=vmem, size = 0x9000, scoped, tag = 'internal scratch']
  %s0 = inlined_call_operand.vmem [shape: f32[16,8], index: 0, kind: input, shape index: {}]
  %s1 = inlined_call_operand.hbm [shape: f32[16,16], index: 1, kind: input, shape index: {}, may-alias: {1,3}]
  %s2 = inlined_call_operand.hbm [shape: f32[16,32], index: 2, kind: output, shape index: {0}]
  %s3 = inlined_call_operand.hbm [shape: f32[16,16], index: 3, kind: output, shape index: {1}, may-alias: {1,3}]
  %4 = xla_tuple %s2, %s3
  %s5 = sld [smem:[#allocation0]]
  $region53: #{tpu_custom_call.1} parent=0
    _
  %s7 = ssub.s32 1, %s5
  %s8 = scalar_select 0, %s7, %s5
  $region1: #{tpu_custom_call.1} parent=0
    #allocation2 [shape = 'u8[8192]{0}', space=vmem, size = 0x2000, scoped, tag = 'input window, operand 1']
    #allocation3 [shape = 's32[2]{0}', space=sflag, size = 0x8, scoped, tag = 'scoped memory for tpu_custom_call.1']
    #allocation4 [shape = 's32[2]{0}', space=sflag, size = 0x8, scoped, tag = 'scoped memory for tpu_custom_call.1']
    #allocation5 [shape = 'u8[8192]{0}', space=vmem, size = 0x2000, scoped, tag = 'output window, operand 0']
    #allocation6 [shape = 'u8[8192]{0}', space=vmem, size = 0x2000, scoped, tag = 'output window, operand 1']
    #allocation7 [shape = 's32[2]{0}', space=sflag, size = 0x8, scoped, tag = 'scoped memory for tpu_custom_call.1']
    %9 = vsyncpa [#allocation3], 0
    %s10 = scalar_lea.sflag [#allocation3], 1
    %11 = vsyncpa %s10, 0
    %12 = vsyncpa [#allocation4], 0
    %s13 = scalar_lea.sflag [#allocation4], 1
    %14 = vsyncpa %s13, 0
    %15 = vsyncpa [#allocation7], 0
    %s16 = scalar_lea.sflag [#allocation7], 1
    %17 = vsyncpa %s16, 0
    loop: start=0, step=1, limit=4
    $region2: #{tpu_custom_call.1} parent=1 // loop_pre_header
      _
    $region3: #{tpu_custom_call.1} parent=1 // loop_header
      %s19 = sphi 0, %s23
      %p20 = scmp.ge.s32.totalorder %s19, 4
      %s29 = sphi 0, %s31
      %s32 = sphi 0, %s29
      %s33 = sphi 0, %s32
      %s49 = sphi 0, %s33
      %s55 = sphi 0, %s57
      %s58 = sphi 0, %s55
      %s59 = sphi 0, %s58
      %s75 = sphi 0, %s59
      %s81 = sphi 0, %s83
      %s84 = sphi 0, %s81
      %s85 = sphi 0, %s84
      %s101 = sphi 0, %s85
      %s107 = sphi 0, %s109
      %s110 = sphi 0, %s107
      %s111 = sphi 0, %s110
      %s127 = sphi 0, %s111
    $region4: #{tpu_custom_call.1} parent=1 // loop_header_branch
      %22 = sbr.rel (%p20) target = $region8
    $region5: #{tpu_custom_call.1} parent=1 // loop_body
      %s24 = ssub.s32 %s19, 1
      %s25 = ssub.s32 %s19, 2
      %s26 = sadd.s32 %s19, 1
      %s27 = ssub.s32 %s19, %s26
      %p28 = scmp.eq.s32.totalorder %s27, 0
      %s30 = sadd.s32 %s29, 1
      %s31 = scalar_select %p28, %s29, %s30
      %p34 = pneg %p28
      %p35 = scmp.eq.s32.totalorder %s19, 1
      %p36 = por %p34, %p35
      %p37 = scmp.ne.s32.totalorder %s29, %s32
      %p38 = scmp.eq.s32.totalorder %s19, 0
      %p39 = por %p37, %p38
      %p40 = scmp.ne.s32.totalorder %s29, %s32
      %p41 = scmp.eq.s32.totalorder %s24, 1
      %p42 = por %p40, %p41
      %p43 = scmp.ne.s32.totalorder %s32, %s33
      %p44 = scmp.eq.s32.totalorder %s24, 0
      %p45 = por %p43, %p44
      %p46 = scmp.ne.s32.totalorder %s32, %s33
      %p47 = scmp.eq.s32.totalorder %s25, 1
      %p48 = por %p46, %p47
      %p50 = scmp.ne.s32.totalorder %s33, %s49
      %p51 = scmp.eq.s32.totalorder %s25, 0
      %p52 = por %p50, %p51
      %s53 = ssub.s32 %s19, %s26
      %p54 = scmp.eq.s32.totalorder %s53, 0
      %s56 = sadd.s32 %s55, 1
      %s57 = scalar_select %p54, %s55, %s56
      %p60 = pneg %p54
      %p61 = scmp.eq.s32.totalorder %s19, 1
      %p62 = por %p60, %p61
      %p63 = scmp.ne.s32.totalorder %s55, %s58
      %p64 = scmp.eq.s32.totalorder %s19, 0
      %p65 = por %p63, %p64
      %p66 = scmp.ne.s32.totalorder %s55, %s58
      %p67 = scmp.eq.s32.totalorder %s24, 1
      %p68 = por %p66, %p67
      %p69 = scmp.ne.s32.totalorder %s58, %s59
      %p70 = scmp.eq.s32.totalorder %s24, 0
      %p71 = por %p69, %p70
      %p72 = scmp.ne.s32.totalorder %s58, %s59
      %p73 = scmp.eq.s32.totalorder %s25, 1
      %p74 = por %p72, %p73
      %p76 = scmp.ne.s32.totalorder %s59, %s75
      %p77 = scmp.eq.s32.totalorder %s25, 0
      %p78 = por %p76, %p77
      %s79 = ssub.s32 %s19, %s26
      %p80 = scmp.eq.s32.totalorder %s79, 0
      %s82 = sadd.s32 %s81, 1
      %s83 = scalar_select %p80, %s81, %s82
      %p86 = pneg %p80
      %p87 = scmp.eq.s32.totalorder %s19, 1
      %p88 = por %p86, %p87
      %p89 = scmp.ne.s32.totalorder %s81, %s84
      %p90 = scmp.eq.s32.totalorder %s19, 0
      %p91 = por %p89, %p90
      %p92 = scmp.ne.s32.totalorder %s81, %s84
      %p93 = scmp.eq.s32.totalorder %s24, 1
      %p94 = por %p92, %p93
      %p95 = scmp.ne.s32.totalorder %s84, %s85
      %p96 = scmp.eq.s32.totalorder %s24, 0
      %p97 = por %p95, %p96
      %p98 = scmp.ne.s32.totalorder %s84, %s85
      %p99 = scmp.eq.s32.totalorder %s25, 1
      %p100 = por %p98, %p99
      %p102 = scmp.ne.s32.totalorder %s85, %s101
      %p103 = scmp.eq.s32.totalorder %s25, 0
      %p104 = por %p102, %p103
      %s105 = ssub.s32 %s19, %s26
      %p106 = scmp.eq.s32.totalorder %s105, 0
      %s108 = sadd.s32 %s107, 1
      %s109 = scalar_select %p106, %s107, %s108
      %p112 = pneg %p106
      %p113 = scmp.eq.s32.totalorder %s19, 1
      %p114 = por %p112, %p113
      %p115 = scmp.ne.s32.totalorder %s107, %s110
      %p116 = scmp.eq.s32.totalorder %s19, 0
      %p117 = por %p115, %p116
      %p118 = scmp.ne.s32.totalorder %s107, %s110
      %p119 = scmp.eq.s32.totalorder %s24, 1
      %p120 = por %p118, %p119
      %p121 = scmp.ne.s32.totalorder %s110, %s111
      %p122 = scmp.eq.s32.totalorder %s24, 0
      %p123 = por %p121, %p122
      %p124 = scmp.ne.s32.totalorder %s110, %s111
      %p125 = scmp.eq.s32.totalorder %s25, 1
      %p126 = por %p124, %p125
      %p128 = scmp.ne.s32.totalorder %s111, %s127
      %p129 = scmp.eq.s32.totalorder %s25, 0
      %p130 = por %p128, %p129
      %p131 = scmp.le.s32.totalorder 1, %s19
      %p132 = scmp.lt.s32.totalorder %s19, 3
      %p133 = pnand %p131, %p132
      %p134 = pneg %p133
      // Predicated region
      $region9: #{tpu_custom_call.1} parent=5 // pred_check
        _
      $region10: #{tpu_custom_call.1} parent=5 // pred_check_branch
        %136 = sbr.rel (%p133) target = $region12
      $region11: #{tpu_custom_call.1} parent=5 // pred_region
        %s137 = ssub.s32 %s19, 1
      $region12: #{tpu_custom_call.1} parent=5 // pred_fallthru
        _
      %p138 = scmp.lt.s32.totalorder %s19, 2
      // Predicated region
      $region13: #{tpu_custom_call.1} parent=5 // pred_check
        %p139 = pneg %p138
      $region14: #{tpu_custom_call.1} parent=5 // pred_check_branch
        %141 = sbr.rel (%p139) target = $region16
      $region15: #{tpu_custom_call.1} parent=5 // pred_region
        // Predicated region
        $region17: #{tpu_custom_call.1} parent=15 // pred_check
          %p142 = pneg %p39
        $region18: #{tpu_custom_call.1} parent=15 // pred_check_branch
          %144 = sbr.rel (%p142) target = $region20
        $region19: #{tpu_custom_call.1} parent=15 // pred_region
          %p145 = scmp.lt.s32.totalorder %s19, 1
          %s146 = scalar_select %p145, %s19, 1
          %s147 = smul.addr %s146, 8
          %s148 = scalar_lea.vmem %s0, %s147
        $region20: #{tpu_custom_call.1} parent=15 // pred_fallthru
          _
        // Predicated region
        $region21: #{tpu_custom_call.1} parent=15 // pred_check
          %p149 = pneg %p65
        $region22: #{tpu_custom_call.1} parent=15 // pred_check_branch
          %151 = sbr.rel (%p149) target = $region24
        $region23: #{tpu_custom_call.1} parent=15 // pred_region
          %s152 = sand.u32 %s55, 1
          %s153 = scalar_lea.sflag [#allocation3], %s152
          %s154 = sand.u32 %s55, 1
          %s155 = smul.addr %s154, 8
          %s156 = scalar_lea.vmem [#allocation2], %s155
          %158 = vsyncadd %s153, 0
          %s159 = smul.addr %s19, 8
          %s160 = scalar_lea.hbm %s1, %s159
          %s162 = sshll.u32 %s160, 4
          %s163 = int_to_ptr.hbm [resolvable:$true] %s162
          %s164 = sshll.u32 %s156, 4
          %s165 = int_to_ptr.vmem [resolvable:$true] %s164
          %167 = dma.hbm_to_vmem [thread:$0]  %s163, 128, %s165, %s153
        $region24: #{tpu_custom_call.1} parent=15 // pred_fallthru
          _
      $region16: #{tpu_custom_call.1} parent=5 // pred_fallthru
        _
      %p168 = scmp.le.s32.totalorder 1, %s19
      %p169 = scmp.lt.s32.totalorder %s19, 3
      %p170 = pnand %p168, %p169
      %p171 = pneg %p170
      // Predicated region
      $region25: #{tpu_custom_call.1} parent=5 // pred_check
        _
      $region26: #{tpu_custom_call.1} parent=5 // pred_check_branch
        %173 = sbr.rel (%p170) target = $region28
      $region27: #{tpu_custom_call.1} parent=5 // pred_region
        %s174 = ssub.s32 %s19, 1
        %s175 = sand.u32 %s58, 1
        %s176 = scalar_lea.sflag [#allocation3], %s175
        %s177 = sand.u32 %s58, 1
        %s178 = smul.addr %s177, 8
        %s179 = scalar_lea.vmem [#allocation2], %s178
        // Predicated region
        $region29: #{tpu_custom_call.1} parent=27 // pred_check
          %p180 = pneg %p71
        $region30: #{tpu_custom_call.1} parent=27 // pred_check_branch
          %182 = sbr.rel (%p180) target = $region32
        $region31: #{tpu_custom_call.1} parent=27 // pred_region
          %184 = dma.done %s176, 128
        $region32: #{tpu_custom_call.1} parent=27 // pred_fallthru
          _
        %p185 = scmp.lt.s32.totalorder %s24, 1
        %s186 = scalar_select %p185, %s24, 1
        %s187 = smul.addr %s186, 8
        %s188 = scalar_lea.vmem %s0, %s187
        %p189 = pneg %p45
        %p190 = pneg %p42
        %s191 = sand.u32 %s58, 1
        %s192 = scalar_lea.sflag [#allocation3], %s191
        %s193 = sand.u32 %s58, 1
        %s194 = smul.addr %s193, 8
        %s195 = scalar_lea.vmem [#allocation2], %s194
        %p196 = pneg %p71
        %p197 = pneg %p68
        %p198 = pneg %p97
        %p199 = pneg %p94
        %s200 = sand.u32 %s84, 1
        %s201 = scalar_lea.sflag [#allocation4], %s200
        %s202 = sand.u32 %s84, 1
        %s203 = smul.addr %s202, 8
        %s204 = scalar_lea.vmem [#allocation5], %s203
        %p205 = pneg %p123
        %p206 = pneg %p120
        %s207 = sand.u32 %s110, 1
        %s208 = scalar_lea.sflag [#allocation7], %s207
        %s209 = sand.u32 %s110, 1
        %s210 = smul.addr %s209, 8
        %s211 = scalar_lea.vmem [#allocation6], %s210
        %p212 = scmp.lt.s32.totalorder %s24, 1
        %s213 = scalar_select %p212, %s24, 1
        %s214 = smul.addr %s213, 8
        %s215 = scalar_lea.vmem %s0, %s214
        %v216 = vld [vmem:[%s179] sm:$0xff]
        %218 = vrot.lane.b32.xlu0 %v216, 124
        %v219 = vpop.permute.xlu0 %218
        %vm221 = vcmask 97280
        %222 = vst.msk [vmem:[%s204] sm:$0xff] %vm221, %v219
        %v223 = vld [vmem:[%s215] sm:$0xff]
        %225 = vrot.lane.b32.xlu0 %v223, 12
        %v226 = vpop.permute.xlu0 %225
        %vm228 = vcmask 130144
        %229 = vst.msk [vmem:[%s204] sm:$0xff] %vm228, %v226
        %v230 = vld [vmem:[%s179] sm:$0xff]
        %232 = vrot.lane.b32.xlu0 %v230, 8
        %v233 = vpop.permute.xlu0 %232
        %vm235 = vcmask 195712
        %236 = vst.msk [vmem:[%s204] sm:$0xff] %vm235, %v233
        %v237 = vld [vmem:[%s215] sm:$0xff]
        %239 = vrot.lane.b32.xlu0 %v237, 24
        %v240 = vpop.permute.xlu0 %239
        %vm242 = vcmask 261312
        %243 = vst.msk [vmem:[%s204] sm:$0xff] %vm242, %v240
        %v244 = vld [vmem:[%s179] sm:$0xff]
        %246 = vrot.lane.b32.xlu0 %v244, 120
        %v247 = vpop.permute.xlu0 %246
        %vm249 = vcmask 64512
        %250 = vst.msk [vmem:[%s211] sm:$0xff] %vm249, %v247
        %v251 = vld [vmem:[%s215] sm:$0xff]
        %253 = vrot.lane.b32.xlu0 %v251, 8
        %v254 = vpop.permute.xlu0 %253
        %vm256 = vcmask 130112
        %257 = vst.msk [vmem:[%s211] sm:$0xff] %vm256, %v254
        %s258 = sand.u32 %s84, 1
        %s259 = scalar_lea.sflag [#allocation4], %s258
        %s260 = sand.u32 %s84, 1
        %s261 = smul.addr %s260, 8
        %s262 = scalar_lea.vmem [#allocation5], %s261
        %s263 = sand.u32 %s110, 1
        %s264 = scalar_lea.sflag [#allocation7], %s263
        %s265 = sand.u32 %s110, 1
        %s266 = smul.addr %s265, 8
        %s267 = scalar_lea.vmem [#allocation6], %s266
        // Predicated region
        $region33: #{tpu_custom_call.1} parent=27 // pred_check
          %p268 = pneg %p94
        $region34: #{tpu_custom_call.1} parent=27 // pred_check_branch
          %270 = sbr.rel (%p268) target = $region36
        $region35: #{tpu_custom_call.1} parent=27 // pred_region
          %272 = vsyncadd %s259, 0
          %s273 = smul.addr %s24, 8
          %s274 = scalar_lea.hbm %s2, %s273
          %s276 = sshll.u32 %s262, 4
          %s277 = int_to_ptr.vmem [resolvable:$true] %s276
          %s278 = sshll.u32 %s274, 4
          %s279 = int_to_ptr.hbm [resolvable:$true] %s278
          %281 = dma.vmem_to_hbm [thread:$0]  %s277, 128, %s279, %s259
        $region36: #{tpu_custom_call.1} parent=27 // pred_fallthru
          _
        // Predicated region
        $region37: #{tpu_custom_call.1} parent=27 // pred_check
          %p282 = pneg %p120
        $region38: #{tpu_custom_call.1} parent=27 // pred_check_branch
          %284 = sbr.rel (%p282) target = $region40
        $region39: #{tpu_custom_call.1} parent=27 // pred_region
          %286 = vsyncadd %s264, 0
          %s287 = smul.addr %s24, 8
          %s288 = scalar_lea.hbm %s3, %s287
          %s290 = sshll.u32 %s267, 4
          %s291 = int_to_ptr.vmem [resolvable:$true] %s290
          %s292 = sshll.u32 %s288, 4
          %s293 = int_to_ptr.hbm [resolvable:$true] %s292
          %295 = dma.vmem_to_hbm [thread:$0]  %s291, 128, %s293, %s264
        $region40: #{tpu_custom_call.1} parent=27 // pred_fallthru
          _
      $region28: #{tpu_custom_call.1} parent=5 // pred_fallthru
        _
      %p296 = scmp.le.s32.totalorder 2, %s19
      // Predicated region
      $region41: #{tpu_custom_call.1} parent=5 // pred_check
        %p297 = pneg %p296
      $region42: #{tpu_custom_call.1} parent=5 // pred_check_branch
        %299 = sbr.rel (%p297) target = $region44
      $region43: #{tpu_custom_call.1} parent=5 // pred_region
        %s300 = ssub.s32 %s19, 2
        // Predicated region
        $region45: #{tpu_custom_call.1} parent=43 // pred_check
          %p301 = pneg %p100
        $region46: #{tpu_custom_call.1} parent=43 // pred_check_branch
          %303 = sbr.rel (%p301) target = $region48
        $region47: #{tpu_custom_call.1} parent=43 // pred_region
          %s304 = sand.u32 %s85, 1
          %s305 = scalar_lea.sflag [#allocation4], %s304
          %s306 = sand.u32 %s85, 1
          %s307 = smul.addr %s306, 8
          %s308 = scalar_lea.vmem [#allocation5], %s307
          %310 = dma.done %s305, 128
        $region48: #{tpu_custom_call.1} parent=43 // pred_fallthru
          _
        // Predicated region
        $region49: #{tpu_custom_call.1} parent=43 // pred_check
          %p311 = pneg %p126
        $region50: #{tpu_custom_call.1} parent=43 // pred_check_branch
          %313 = sbr.rel (%p311) target = $region52
        $region51: #{tpu_custom_call.1} parent=43 // pred_region
          %s314 = sand.u32 %s111, 1
          %s315 = scalar_lea.sflag [#allocation7], %s314
          %s316 = sand.u32 %s111, 1
          %s317 = smul.addr %s316, 8
          %s318 = scalar_lea.vmem [#allocation6], %s317
          %320 = dma.done %s315, 128
        $region52: #{tpu_custom_call.1} parent=43 // pred_fallthru
          _
      $region44: #{tpu_custom_call.1} parent=5 // pred_fallthru
        _
    $region6: #{tpu_custom_call.1} parent=1 // loop_footer
      %s23 = sadd.s32 1, %s19
    $region7: #{tpu_custom_call.1} parent=1 // loop_footer_branch
      %18 = sbr.rel target = $region3
    $region8: #{tpu_custom_call.1} parent=1 // loop_exit
      _
    %321 = vsyncpa [#allocation3], 1
    %s322 = scalar_lea.sflag [#allocation3], 1
    %323 = vsyncpa %s322, 1
    %324 = vsyncpa [#allocation4], 1
    %s325 = scalar_lea.sflag [#allocation4], 1
    %326 = vsyncpa %s325, 1
    %327 = vsyncpa [#allocation7], 1
    %s328 = scalar_lea.sflag [#allocation7], 1
    %329 = vsyncpa %s328, 1

</llo_original>
